<compile_context>
chip_gen: v7x
topology: tpu7x:2x2x1
jax: 0.10.0
libtpu: 0.0.40
codegen_flags: <defaults>
</compile_context>

<pallas_src>
import jax
import jax.numpy as jnp
from jax.experimental import pallas as pl
from jax.experimental.pallas import tpu as pltpu


def _ensemble_linear_kernel(x_ref, r_ref, w_ref, s_ref, b_ref, o_ref):
    """x_ref: (TM, IN) flattened (batch, k) rows.  w_ref: (IN, OUT_P) pre-transposed.
    r_ref: (TM, IN), s_ref: (TM, OUT_P) pre-tiled scalings.  b_ref: (1, OUT_P) f32."""
    xr = x_ref[...] * r_ref[...]                        # VPU; rides under the DMA
    y = jnp.dot(xr, w_ref[...],
                preferred_element_type=jnp.float32)     # MXU, f32 accumulate
    y = y * s_ref[...] + b_ref[...]                     # output scaling + shared bias
    o_ref[...] = y.astype(o_ref.dtype)


def _tensorcores_per_chip() -> int:
    """Best-effort TensorCore count (2 on v7x, 1 on v5e/v6e); safe fallback = 1."""
    try:
        info = pltpu.get_tpu_info()
        for attr in ("num_cores", "num_tensorcores", "cores_per_chip",
                     "num_cores_per_chip", "tensorcores_per_chip"):
            v = getattr(info, attr, None)
            if isinstance(v, int) and v > 0:
                return v
    except Exception:
        pass
    try:
        v = getattr(jax.devices()[0], "num_cores", None)
        if isinstance(v, int) and v > 0:
            return v
    except Exception:
        pass
    return 1


def _choose_tb(B, K, in_row_bytes, out_row_bytes, *, target_bytes=2 << 20, min_steps=1):
    """Batch elements per grid step, sized by BYTES (~target_bytes for the x block,
    ~2x that allowed for the out block), such that
      * tb divides B              (no pad / slice HBM passes over x / out),
      * (tb*K) % 8 == 0 or tb==B  (sublane-dense blocks),
      * at least `min_steps` grid steps (megacore on 2-TC chips, prefer even split)."""
    target_rows = max(1, min(target_bytes // max(1, in_row_bytes),
                             (2 * target_bytes) // max(1, out_row_bytes)))
    target_tb = max(1, target_rows // max(1, K))
    divisors = [d for d in range(1, B + 1) if B % d == 0]
    ok = [d for d in divisors if (d * K) % 8 == 0 or d == B] or [B]
    feasible = [d for d in ok if B // d >= min_steps] or ok
    under = [d for d in feasible if d <= target_tb]
    if under:
        if min_steps > 1:
            balanced = [d for d in under if (B // d) % min_steps == 0]
            if balanced:
                return max(balanced)
        return max(under)
    # No divisor under the byte target (e.g. awkward/prime B): fall back to the
    # smallest feasible block rather than padding (pad/slice = extra HBM passes).
    return min(feasible)


def linear_efficient_ensemble(x, weight, r=None, s=None, bias=None, *,
                              compute_dtype=jnp.bfloat16, out_dtype=None, tb=None):
    """Forward pass of LinearEfficientEnsemble.
    x: (B, K, IN); weight: (OUT, IN); r: (K, IN)|None; s: (K, OUT)|None; bias: (OUT,)|None."""
    B, K, IN = x.shape
    OUT = weight.shape[0]
    out_dtype = x.dtype if out_dtype is None else out_dtype

    # Missing optional parts become exact identities (VPU work is free under the DMA).
    if r is None:
        r = jnp.ones((K, IN), x.dtype)
    if s is None:
        s = jnp.ones((K, OUT), x.dtype)
    if bias is None:
        bias = jnp.zeros((OUT,), jnp.float32)

    # Lane-dense output: pad OUT to a multiple of 128 (loop-invariant params only);
    # padded columns compute to exactly zero and are sliced off after the kernel.
    pad = (-OUT) % 128
    OUT_P = OUT + pad

    # One-time, loop-invariant parameter prep (tiny; outside the kernel).
    w_t = jnp.pad(weight.T.astype(compute_dtype), ((0, 0), (0, pad)))    # (IN, OUT_P)
    s_p = jnp.pad(s.astype(compute_dtype), ((0, 0), (0, pad)))           # (K, OUT_P)
    b_p = jnp.pad(bias.astype(jnp.float32), (0, pad)).reshape(1, OUT_P)  # (1, OUT_P)
    r_c = r.astype(compute_dtype)                                        # (K, IN)

    # Block sizing by bytes; keep >= 2 grid steps only when the chip has 2 TensorCores.
    cores = _tensorcores_per_chip()
    in_row_bytes = IN * jnp.dtype(compute_dtype).itemsize
    out_row_bytes = OUT_P * jnp.dtype(out_dtype).itemsize
    if tb is None:
        tb = _choose_tb(B, K, in_row_bytes, out_row_bytes,
                        min_steps=2 if cores >= 2 else 1)
    assert B % tb == 0, "tb must divide B (avoids pad / slice HBM passes)"
    n_steps = B // tb
    TM = tb * K                                  # folded MXU M dimension per grid step

    # Flatten (B, K) -> rows in the wrapper (contiguous reshape, no in-kernel relayout);
    # tile r / s so each block row b*K+k sees its member's scaling directly.
    x_flat = x.astype(compute_dtype).reshape(B * K, IN)
    r_tile = jnp.tile(r_c, (tb, 1))              # (TM, IN)
    s_tile = jnp.tile(s_p, (tb, 1))              # (TM, OUT_P)

    # Explicit VMEM budget: x/out blocks are double-buffered; invariants counted twice
    # conservatively (not single-buffered here -- see TODO at top of file for v7x).
    inv_bytes = ((w_t.size + r_tile.size + s_tile.size)
                 * jnp.dtype(compute_dtype).itemsize + b_p.size * 4)
    est_bytes = 2 * (TM * in_row_bytes + TM * out_row_bytes) + 2 * inv_bytes
    vmem_limit = int(min(64 << 20, max(4 << 20, 2 * est_bytes)))

    out = pl.pallas_call(
        _ensemble_linear_kernel,
        out_shape=jax.ShapeDtypeStruct((B * K, OUT_P), out_dtype),
        grid_spec=pltpu.PrefetchScalarGridSpec(
            num_scalar_prefetch=0,
            grid=(n_steps,),
            in_specs=[
                pl.BlockSpec((TM, IN), lambda i: (i, 0)),      # x      (pipelined)
                pl.BlockSpec((TM, IN), lambda i: (0, 0)),      # r      (loop-invariant)
                pl.BlockSpec((IN, OUT_P), lambda i: (0, 0)),   # W^T    (loop-invariant)
                pl.BlockSpec((TM, OUT_P), lambda i: (0, 0)),   # s      (loop-invariant)
                pl.BlockSpec((1, OUT_P), lambda i: (0, 0)),    # bias   (loop-invariant)
            ],
            out_specs=pl.BlockSpec((TM, OUT_P), lambda i: (i, 0)),
        ),
        compiler_params=pltpu.CompilerParams(
            dimension_semantics=("parallel",),   # megacore-shards batch on 2-TC chips
            vmem_limit_bytes=vmem_limit,
        ),
    )(x_flat, r_tile, w_t, s_tile, b_p)

    out = out.reshape(B, K, OUT_P)
    return out[..., :OUT] if pad else out


def _init_params(key, in_features, out_features, k):
    """Deterministic parameter init mirroring reset_parameters():
       weight, bias ~ U(-1/sqrt(in), 1/sqrt(in)); r, s = random signs in {-1, +1}."""
    kw, kb, kr, ks = jax.random.split(key, 4)
    d_rsqrt = in_features ** -0.5
    weight = jax.random.uniform(kw, (out_features, in_features),
                                minval=-d_rsqrt, maxval=d_rsqrt, dtype=jnp.float32)
    bias = jax.random.uniform(kb, (out_features,),
                              minval=-d_rsqrt, maxval=d_rsqrt, dtype=jnp.float32)
    # scaling_init='random-signs': bernoulli(0.5) * 2 - 1
    r = jax.random.bernoulli(kr, 0.5, (k, in_features)).astype(jnp.float32) * 2.0 - 1.0
    s = jax.random.bernoulli(ks, 0.5, (k, out_features)).astype(jnp.float32) * 2.0 - 1.0
    return weight, bias, r, s


if __name__ == "__main__":
    # Small, module-consistent shapes: batch=8, k=4 ensemble members, in=32, out=64.
    B, K, IN, OUT = 8, 4, 32, 64

    key = jax.random.PRNGKey(0)
    kx, kp = jax.random.split(key)
    x = jax.random.normal(kx, (B, K, IN), dtype=jnp.float32)
    weight, bias, r, s = _init_params(kp, IN, OUT, K)

    # Pure-JAX reference of the module's forward pass (f32).
    ref = ((x * r) @ weight.T) * s + bias

    # 1) Exact-precision path: f32 operands (matches the PyTorch module bit-for-bit-ish).
    out_f32 = jax.block_until_ready(
        linear_efficient_ensemble(x, weight, r, s, bias, compute_dtype=jnp.float32))
    assert out_f32.shape == (B, K, OUT)
    assert jnp.allclose(out_f32, ref, atol=1e-5, rtol=1e-5), "f32 mismatch vs reference"

    # 2) Production path (per perf review): bf16 operands on the MXU, f32 accumulate.
    #    r/s are +-1 so the scalings stay exact; only x/weight bf16 rounding remains.
    out_bf16 = jax.block_until_ready(linear_efficient_ensemble(x, weight, r, s, bias))
    assert out_bf16.shape == (B, K, OUT)
    assert jnp.allclose(out_bf16, ref, atol=5e-2, rtol=5e-2), "bf16 mismatch vs reference"

    print("KERNEL_OK")
</pallas_src>

<mosaic_0001>
module attributes {stable_mosaic.version = 11 : i64} {
  func.func @_ensemble_linear_kernel(%arg0: i32, %arg1: memref<32x32xf32, #tpu.memory_space<vmem>>, %arg2: memref<32x32xf32, #tpu.memory_space<vmem>>, %arg3: memref<32x128xf32, #tpu.memory_space<vmem>>, %arg4: memref<32x128xf32, #tpu.memory_space<vmem>>, %arg5: memref<1x128xf32, #tpu.memory_space<vmem>>, %arg6: memref<32x128xf32, #tpu.memory_space<vmem>>) attributes {dimension_semantics = [#tpu.dimension_semantics<parallel>], iteration_bounds = array<i64: 1>, scalar_prefetch = 0 : i64, scratch_operands = 0 : i64, tpu.core_type = #tpu.core_type<tc>, window_params = [{transform_indices = @transform_0, window_bounds = array<i64: 32, 32>}, {pipeline_mode = #tpu.pipeline_mode<synchronous>, transform_indices = @transform_1, window_bounds = array<i64: 32, 32>}, {pipeline_mode = #tpu.pipeline_mode<synchronous>, transform_indices = @transform_2, window_bounds = array<i64: 32, 128>}, {pipeline_mode = #tpu.pipeline_mode<synchronous>, transform_indices = @transform_3, window_bounds = array<i64: 32, 128>}, {pipeline_mode = #tpu.pipeline_mode<synchronous>, transform_indices = @transform_4, window_bounds = array<i64: 1, 128>}, {transform_indices = @transform_5, window_bounds = array<i64: 32, 128>}]} {
    %c0 = arith.constant 0 : index
    %c0_0 = arith.constant 0 : index
    %0 = vector.load %arg1[%c0, %c0_0] : memref<32x32xf32, #tpu.memory_space<vmem>>, vector<32x32xf32>
    %c0_1 = arith.constant 0 : index
    %c0_2 = arith.constant 0 : index
    %1 = vector.load %arg2[%c0_1, %c0_2] : memref<32x32xf32, #tpu.memory_space<vmem>>, vector<32x32xf32>
    %2 = arith.mulf %0, %1 : vector<32x32xf32>
    %c0_3 = arith.constant 0 : index
    %c0_4 = arith.constant 0 : index
    %3 = vector.load %arg3[%c0_3, %c0_4] : memref<32x128xf32, #tpu.memory_space<vmem>>, vector<32x128xf32>
    %cst = arith.constant dense<0.000000e+00> : vector<32x128xf32>
    %4 = tpu.matmul %2, %3, %cst {dimension_numbers = #tpu.dot_dimension_numbers<[1], [0], [0], [1], [0, 0, 1, 1], [], []>} : vector<32x32xf32>, vector<32x128xf32>, vector<32x128xf32> -> vector<32x128xf32>
    %c0_5 = arith.constant 0 : index
    %c0_6 = arith.constant 0 : index
    %5 = vector.load %arg4[%c0_5, %c0_6] : memref<32x128xf32, #tpu.memory_space<vmem>>, vector<32x128xf32>
    %6 = arith.mulf %4, %5 : vector<32x128xf32>
    %c0_7 = arith.constant 0 : index
    %c0_8 = arith.constant 0 : index
    %7 = vector.load %arg5[%c0_7, %c0_8] : memref<1x128xf32, #tpu.memory_space<vmem>>, vector<1x128xf32>
    %8 = vector.broadcast %7 : vector<1x128xf32> to vector<32x128xf32>
    %9 = arith.addf %6, %8 : vector<32x128xf32>
    %c0_9 = arith.constant 0 : index
    %c0_10 = arith.constant 0 : index
    %10 = vector.load %arg6[%c0_9, %c0_10] : memref<32x128xf32, #tpu.memory_space<vmem>>, vector<32x128xf32>
    tpu.vector_store %arg6[%c0_9, %c0_10], %9 {strides = array<i32>} : memref<32x128xf32, #tpu.memory_space<vmem>>, vector<32x128xf32>,
    return
  }
  func.func @transform_0(%arg0: i32) -> (i32, i32) {
    %c0_i32 = arith.constant 0 : i32
    %c0_i32_0 = arith.constant 0 : i32
    return %arg0, %c0_i32 : i32, i32
  }
  func.func @transform_1(%arg0: i32) -> (i32, i32) {
    %c0_i32 = arith.constant 0 : i32
    %c0_i32_0 = arith.constant 0 : i32
    %c0_i32_1 = arith.constant 0 : i32
    return %c0_i32, %c0_i32_0 : i32, i32
  }
  func.func @transform_2(%arg0: i32) -> (i32, i32) {
    %c0_i32 = arith.constant 0 : i32
    %c0_i32_0 = arith.constant 0 : i32
    %c0_i32_1 = arith.constant 0 : i32
    return %c0_i32, %c0_i32_0 : i32, i32
  }
  func.func @transform_3(%arg0: i32) -> (i32, i32) {
    %c0_i32 = arith.constant 0 : i32
    %c0_i32_0 = arith.constant 0 : i32
    %c0_i32_1 = arith.constant 0 : i32
    return %c0_i32, %c0_i32_0 : i32, i32
  }
  func.func @transform_4(%arg0: i32) -> (i32, i32) {
    %c0_i32 = arith.constant 0 : i32
    %c0_i32_0 = arith.constant 0 : i32
    %c0_i32_1 = arith.constant 0 : i32
    return %c0_i32, %c0_i32_0 : i32, i32
  }
  func.func @transform_5(%arg0: i32) -> (i32, i32) {
    %c0_i32 = arith.constant 0 : i32
    %c0_i32_0 = arith.constant 0 : i32
    return %arg0, %c0_i32 : i32, i32
  }
}

</mosaic_0001>

<llo_original>
// kernel: tpu_custom_call.1
$region0: #{tpu_custom_call.1}
  #allocation0 [shape = 'u32[]', space=smem, size = 0x4, offset = 0x4, fixed_abs, tag = 'smem constant byte address 0x4 - core index']
  #allocation1 [shape = 'u32[144,128]{1,0:T(1,128)}', space=vmem, size = 0x12000, scoped, tag = 'internal scratch']
  %s0 = inlined_call_operand.hbm [shape: f32[32,32], index: 0, kind: input, shape index: {}]
  %s1 = inlined_call_operand.hbm [shape: f32[32,32], index: 1, kind: input, shape index: {}]
  %s2 = inlined_call_operand.hbm [shape: f32[32,128], index: 2, kind: input, shape index: {}]
  %s3 = inlined_call_operand.hbm [shape: f32[32,128], index: 3, kind: input, shape index: {}]
  %s4 = inlined_call_operand.vmem [shape: f32[1,128], index: 4, kind: input, shape index: {}]
  %s5 = inlined_call_operand.hbm [shape: f32[32,128], index: 5, kind: output, shape index: {}]
  %s6 = sld [smem:[#allocation0]]
  $region46: #{tpu_custom_call.1} parent=0
    _
  %s8 = ssub.s32 1, %s6
  %s9 = scalar_select 0, %s8, %s6
  $region1: #{tpu_custom_call.1} parent=0
    #allocation2 [shape = 'u8[16384]{0}', space=vmem, size = 0x4000, scoped, tag = 'input window, operand 0, single buffered']
    #allocation3 [shape = 's32[1]{0}', space=sflag, size = 0x4, scoped, tag = 'scoped memory for tpu_custom_call.1']
    #allocation4 [shape = 's32[1]{0}', space=sflag, size = 0x4, scoped, tag = 'scoped memory for tpu_custom_call.1']
    #allocation5 [shape = 'u8[16384]{0}', space=vmem, size = 0x4000, scoped, tag = 'input window, operand 1, single buffered']
    #allocation6 [shape = 's32[1]{0}', space=sflag, size = 0x4, scoped, tag = 'scoped memory for tpu_custom_call.1']
    #allocation7 [shape = 'u8[16384]{0}', space=vmem, size = 0x4000, scoped, tag = 'input window, operand 2, single buffered']
    #allocation8 [shape = 'u8[16384]{0}', space=vmem, size = 0x4000, scoped, tag = 'input window, operand 3, single buffered']
    #allocation9 [shape = 's32[1]{0}', space=sflag, size = 0x4, scoped, tag = 'scoped memory for tpu_custom_call.1']
    #allocation10 [shape = 'u8[16384]{0}', space=vmem, size = 0x4000, scoped, tag = 'output window, operand 0, single buffered']
    %10 = vsyncpa [#allocation3], 0
    %11 = vsyncpa [#allocation6], 0
    %12 = vsyncpa [#allocation9], 0
    %13 = vsyncpa [#allocation4], 0
    // Predicated region
    $region2: #{tpu_custom_call.1} parent=1 // pred_check
      _
    $region3: #{tpu_custom_call.1} parent=1 // pred_check_branch
      %15 = sbr.rel (0) target = $region5
    $region4: #{tpu_custom_call.1} parent=1 // pred_region
      %s17 = ssub.s32 512, 512
      %18 = vsyncadd [#allocation3], %s17
      %s19 = sshll.u32 [#allocation2], 4
      %s20 = int_to_ptr.vmem [resolvable:$true] %s19
      %25 = dma.hbm_to_vmem [thread:$0]  %s0, 512, %s20, [#allocation3], 128, 128, 8
    $region5: #{tpu_custom_call.1} parent=1 // pred_fallthru
      _
    // Predicated region
    $region6: #{tpu_custom_call.1} parent=1 // pred_check
      _
    $region7: #{tpu_custom_call.1} parent=1 // pred_check_branch
      %27 = sbr.rel (0) target = $region9
    $region8: #{tpu_custom_call.1} parent=1 // pred_region
      %s29 = ssub.s32 512, 512
      %30 = vsyncadd [#allocation6], %s29
      %s31 = sshll.u32 [#allocation5], 4
      %s32 = int_to_ptr.vmem [resolvable:$true] %s31
      %37 = dma.hbm_to_vmem [thread:$0]  %s1, 512, %s32, [#allocation6], 128, 128, 8
    $region9: #{tpu_custom_call.1} parent=1 // pred_fallthru
      _
    // Predicated region
    $region10: #{tpu_custom_call.1} parent=1 // pred_check
      _
    $region11: #{tpu_custom_call.1} parent=1 // pred_check_branch
      %39 = sbr.rel (0) target = $region13
    $region12: #{tpu_custom_call.1} parent=1 // pred_region
      %s41 = ssub.s32 512, 512
      %42 = vsyncadd [#allocation6], %s41
      %s43 = sshll.u32 [#allocation7], 4
      %s44 = int_to_ptr.vmem [resolvable:$true] %s43
      %49 = dma.hbm_to_vmem [thread:$0]  %s2, 512, %s44, [#allocation6], 128, 128, 8
    $region13: #{tpu_custom_call.1} parent=1 // pred_fallthru
      _
    // Predicated region
    $region14: #{tpu_custom_call.1} parent=1 // pred_check
      _
    $region15: #{tpu_custom_call.1} parent=1 // pred_check_branch
      %51 = sbr.rel (0) target = $region17
    $region16: #{tpu_custom_call.1} parent=1 // pred_region
      %s53 = ssub.s32 512, 512
      %54 = vsyncadd [#allocation9], %s53
      %s55 = sshll.u32 [#allocation8], 4
      %s56 = int_to_ptr.vmem [resolvable:$true] %s55
      %61 = dma.hbm_to_vmem [thread:$0]  %s3, 512, %s56, [#allocation9], 128, 128, 8
    $region17: #{tpu_custom_call.1} parent=1 // pred_fallthru
      _
    // Predicated region
    $region18: #{tpu_custom_call.1} parent=1 // pred_check
      _
    $region19: #{tpu_custom_call.1} parent=1 // pred_check_branch
      %63 = sbr.rel (0) target = $region21
    $region20: #{tpu_custom_call.1} parent=1 // pred_region
      _
    $region21: #{tpu_custom_call.1} parent=1 // pred_fallthru
      _
    // Predicated region
    $region22: #{tpu_custom_call.1} parent=1 // pred_check
      _
    $region23: #{tpu_custom_call.1} parent=1 // pred_check_branch
      %65 = sbr.rel (0) target = $region25
    $region24: #{tpu_custom_call.1} parent=1 // pred_region
      %66 = dma.done [#allocation3], 512
    $region25: #{tpu_custom_call.1} parent=1 // pred_fallthru
      _
    // Predicated region
    $region26: #{tpu_custom_call.1} parent=1 // pred_check
      _
    $region27: #{tpu_custom_call.1} parent=1 // pred_check_branch
      %68 = sbr.rel (0) target = $region29
    $region28: #{tpu_custom_call.1} parent=1 // pred_region
      %69 = dma.done [#allocation6], 512
    $region29: #{tpu_custom_call.1} parent=1 // pred_fallthru
      _
    // Predicated region
    $region30: #{tpu_custom_call.1} parent=1 // pred_check
      _
    $region31: #{tpu_custom_call.1} parent=1 // pred_check_branch
      %71 = sbr.rel (0) target = $region33
    $region32: #{tpu_custom_call.1} parent=1 // pred_region
      %72 = dma.done [#allocation6], 512
    $region33: #{tpu_custom_call.1} parent=1 // pred_fallthru
      _
    // Predicated region
    $region34: #{tpu_custom_call.1} parent=1 // pred_check
      _
    $region35: #{tpu_custom_call.1} parent=1 // pred_check_branch
      %74 = sbr.rel (0) target = $region37
    $region36: #{tpu_custom_call.1} parent=1 // pred_region
      %75 = dma.done [#allocation9], 512
    $region37: #{tpu_custom_call.1} parent=1 // pred_fallthru
      _
    %v76 = vld [vmem:[#allocation2] sm:$0xff]
    %v77 = vld [vmem:[#allocation2 + $0x8] sm:$0xff]
    %v78 = vld [vmem:[#allocation2 + $0x10] sm:$0xff]
    %v79 = vld [vmem:[#allocation2 + $0x18] sm:$0xff]
    %v80 = vld [vmem:[#allocation5] sm:$0xff]
    %v81 = vld [vmem:[#allocation5 + $0x8] sm:$0xff]
    %v82 = vld [vmem:[#allocation5 + $0x10] sm:$0xff]
    %v83 = vld [vmem:[#allocation5 + $0x18] sm:$0xff]
    %v84 = vmul.f32 %v76, %v80
    %v85 = vmul.f32 %v77, %v81
    %v86 = vmul.f32 %v78, %v82
    %v87 = vmul.f32 %v79, %v83
    %v88 = vld [vmem:[#allocation7] sm:$0xff]
    %v89 = vld [vmem:[#allocation7 + $0x8] sm:$0xff]
    %v90 = vld [vmem:[#allocation7 + $0x10] sm:$0xff]
    %v91 = vld [vmem:[#allocation7 + $0x18] sm:$0xff]
    %vm92 = vcmask 261120
    %v94 = vsel %vm92, %v84, 0
    %v97 = vsel %vm92, %v85, 0
    %v100 = vsel %vm92, %v86, 0
    %v103 = vsel %vm92, %v87, 0
    %105 = vmatprep.subr.mxu0 0.0
    %106 = vmatpush1.msra.mxu0 %v88
    %107 = vmatprep.subr.mxu0 0.0
    %108 = vmatpush1.msra.mxu0 %v89
    %109 = vmatprep.subr.mxu0 0.0
    %110 = vmatpush1.msra.mxu0 %v90
    %111 = vmatprep.subr.mxu0 0.0
    %112 = vmatpush1.msra.mxu0 %v91
    %113 = vmatprep.subr.mxu0 0.0
    %114 = vmatpush1.msra.mxu0 0.0
    %115 = vmatprep.subr.mxu0 0.0
    %116 = vmatpush1.msra.mxu0 0.0
    %117 = vmatprep.subr.mxu0 0.0
    %118 = vmatpush1.msra.mxu0 0.0
    %119 = vmatprep.subr.mxu0 0.0
    %120 = vmatpush1.msra.mxu0 0.0
    %121 = vmatprep.subr.mxu0 0.0
    %122 = vmatpush1.msra.mxu0 0.0
    %123 = vmatprep.subr.mxu0 0.0
    %124 = vmatpush1.msra.mxu0 0.0
    %125 = vmatprep.subr.mxu0 0.0
    %126 = vmatpush1.msra.mxu0 0.0
    %127 = vmatprep.subr.mxu0 0.0
    %128 = vmatpush1.msra.mxu0 0.0
    %129 = vmatprep.subr.mxu0 0.0
    %130 = vmatpush1.msra.mxu0 0.0
    %131 = vmatprep.subr.mxu0 0.0
    %132 = vmatpush1.msra.mxu0 0.0
    %133 = vmatprep.subr.mxu0 0.0
    %134 = vmatpush1.msra.mxu0 0.0
    %135 = vmatprep.subr.mxu0 0.0
    %136 = vmatpush1.msra.mxu0 0.0
    %137 = vmatprep.subr.mxu0 0.0
    %138 = vmatpush1.msra.mxu0 0.0
    %139 = vmatprep.subr.mxu0 0.0
    %140 = vmatpush1.msra.mxu0 0.0
    %141 = vmatprep.subr.mxu0 0.0
    %142 = vmatpush1.msra.mxu0 0.0
    %143 = vmatprep.subr.mxu0 0.0
    %144 = vmatpush1.msra.mxu0 0.0
    %145 = vmatprep.subr.mxu0 0.0
    %146 = vmatpush1.msra.mxu0 0.0
    %147 = vmatprep.subr.mxu0 0.0
    %148 = vmatpush1.msra.mxu0 0.0
    %149 = vmatprep.subr.mxu0 0.0
    %150 = vmatpush1.msra.mxu0 0.0
    %151 = vmatprep.subr.mxu0 0.0
    %152 = vmatpush1.msra.mxu0 0.0
    %153 = vmatprep.subr.mxu0 0.0
    %154 = vmatpush1.msra.mxu0 0.0
    %155 = vmatprep.subr.mxu0 0.0
    %156 = vmatpush1.msra.mxu0 0.0
    %157 = vmatprep.subr.mxu0 0.0
    %158 = vmatpush1.msra.mxu0 0.0
    %159 = vmatprep.subr.mxu0 0.0
    %160 = vmatpush1.msra.mxu0 0.0
    %161 = vmatprep.subr.mxu0 0.0
    %162 = vmatpush1.msra.mxu0 0.0
    %163 = vmatprep.subr.mxu0 0.0
    %164 = vmatpush1.msra.mxu0 0.0
    %165 = vmatprep.subr.mxu0 0.0
    %166 = vmatpush1.msra.mxu0 0.0
    %167 = vmatprep.subr.mxu0 0.0
    %168 = vmatpush1.msra.mxu0 0.0
    %169 = vmatprep.mubr.f32.mxu0 0.0
    %170 = vmatmul.mubr.f32.gmra.mrb[0].mxu0 %v94
    %v171 = vpop.f32.mrb[0].mxu0
    %v172 = vadd.f32 0.0, %v171
    %v173 = vpop.f32.mrb[0].mxu0
    %174 = vmatprep.mubr.f32.mxu0 0.0
    %175 = vmatmul.mubr.f32.gmra.mrb[0].mxu0 %v97
    %v176 = vpop.f32.mrb[0].mxu0
    %v177 = vadd.f32 0.0, %v176
    %v178 = vpop.f32.mrb[0].mxu0
    %179 = vmatprep.mubr.f32.mxu0 0.0
    %180 = vmatmul.mubr.f32.gmra.mrb[0].mxu0 %v100
    %v181 = vpop.f32.mrb[0].mxu0
    %v182 = vadd.f32 0.0, %v181
    %v183 = vpop.f32.mrb[0].mxu0
    %184 = vmatprep.mubr.f32.mxu0 0.0
    %185 = vmatmul.mubr.f32.gmra.mrb[0].mxu0 %v103
    %v186 = vpop.f32.mrb[0].mxu0
    %v187 = vadd.f32 0.0, %v186
    %v188 = vpop.f32.mrb[0].mxu0
    %189 = vdwg.mxu0
    %v190 = vld [vmem:[#allocation8] sm:$0xff]
    %v191 = vld [vmem:[#allocation8 + $0x8] sm:$0xff]
    %v192 = vld [vmem:[#allocation8 + $0x10] sm:$0xff]
    %v193 = vld [vmem:[#allocation8 + $0x18] sm:$0xff]
    %v194 = vmul.f32 %v172, %v190
    %v195 = vmul.f32 %v177, %v191
    %v196 = vmul.f32 %v182, %v192
    %v197 = vmul.f32 %v187, %v193
    %v198 = vld [vmem:[%s4] sm:$0x1]
    %v200 = vlaneseq
    %v201 = vshrl.u32 %v200, 7
    %v202 = vsub.s32 0, %v201
    %v203 = vrot.slane %v198, %v202
    %v205 = vadd.f32 %v194, %v203
    %v206 = vadd.f32 %v195, %v203
    %v207 = vadd.f32 %v196, %v203
    %v208 = vadd.f32 %v197, %v203
    %209 = vst [vmem:[#allocation10] sm:$0xff] %v205
    %210 = vst [vmem:[#allocation10 + $0x8] sm:$0xff] %v206
    %211 = vst [vmem:[#allocation10 + $0x10] sm:$0xff] %v207
    %212 = vst [vmem:[#allocation10 + $0x18] sm:$0xff] %v208
    // Predicated region
    $region38: #{tpu_custom_call.1} parent=1 // pred_check
      _
    $region39: #{tpu_custom_call.1} parent=1 // pred_check_branch
      %214 = sbr.rel (0) target = $region41
    $region40: #{tpu_custom_call.1} parent=1 // pred_region
      %s216 = ssub.s32 512, 512
      %217 = vsyncadd [#allocation4], %s216
      %s218 = sshll.u32 [#allocation10], 4
      %s219 = int_to_ptr.vmem [resolvable:$true] %s218
      %224 = dma.vmem_to_hbm [thread:$0]  %s219, 512, %s5, [#allocation4], 128, 128, 8
    $region41: #{tpu_custom_call.1} parent=1 // pred_fallthru
      _
    // Predicated region
    $region42: #{tpu_custom_call.1} parent=1 // pred_check
      _
    $region43: #{tpu_custom_call.1} parent=1 // pred_check_branch
      %226 = sbr.rel (0) target = $region45
    $region44: #{tpu_custom_call.1} parent=1 // pred_region
      %227 = dma.done [#allocation4], 512
    $region45: #{tpu_custom_call.1} parent=1 // pred_fallthru
      _
    %228 = vsyncpa [#allocation3], 1
    %229 = vsyncpa [#allocation6], 1
    %230 = vsyncpa [#allocation9], 1
    %231 = vsyncpa [#allocation4], 1

</llo_original>
